<compile_context>
chip_gen: v5e
topology: v5e:2x2
jax: 0.10.0
libtpu: 0.0.40
codegen_flags: <defaults>
</compile_context>

<pallas_src>
import jax
import jax.numpy as jnp
from jax import lax
from jax.experimental import pallas as pl
from jax.experimental.pallas import tpu as pltpu


def _round_up(x, m):
    return ((x + m - 1) // m) * m


def _pad2d(a, rows, cols):
    return jnp.pad(a, ((0, rows - a.shape[0]), (0, cols - a.shape[1])))


_COMPILER_PARAMS = pltpu.CompilerParams(
    dimension_semantics=("parallel", "arbitrary"),
    vmem_limit_bytes=48 * 1024 * 1024,  # headroom under v7x's 64 MiB physical VMEM
)


# ---------------- kernel A: intra-edge aggregation ----------------
def _edge_kernel(incT_ref, x_ref, inv_deg_e_ref, mep_ref, acc_ref):
    """edge_mean[e,:] = (1/|B(e)|) * sum_{v in e} x[v,:]**2  (p=2 generalized mean, pre-root)."""
    n = pl.program_id(1)

    @pl.when(n == 0)
    def _():
        acc_ref[...] = jnp.zeros_like(acc_ref)

    x = x_ref[...]                          # f32 (TN, Fin): square in f32 (v5e VPU has no bf16)
    xp = (x * x).astype(jnp.bfloat16)       # bf16 MXU operand, f32 accumulation
    acc_ref[...] += jnp.dot(incT_ref[...], xp, preferred_element_type=jnp.float32)

    @pl.when(n == pl.num_programs(1) - 1)
    def _():
        # scale the matmul OUTPUT by 1/deg_e instead of normalizing the incidence matrix
        mep_ref[...] = (acc_ref[...] * inv_deg_e_ref[...]).astype(mep_ref.dtype)


# ---------------- kernel B: inter-edge aggregation + linear/normalize/ReLU update ----------------
def _node_kernel(inc_ref, mep_ref, inv_deg_v_ref, w_ref, o_ref, acc_ref):
    e = pl.program_id(1)

    @pl.when(e == 0)
    def _():
        acc_ref[...] = jnp.zeros_like(acc_ref)

    acc_ref[...] += jnp.dot(inc_ref[...], mep_ref[...], preferred_element_type=jnp.float32)

    @pl.when(e == pl.num_programs(1) - 1)
    def _():
        # m_v = ((1/|C(v)|) * sum_{e∋v} m_e^2)^(1/2);  m_e^2 == edge_mean (sqrt/square cancel)
        m_node = jnp.sqrt(acc_ref[...] * inv_deg_v_ref[...])
        z = jnp.dot(m_node, w_ref[...], preferred_element_type=jnp.float32)
        ss = jnp.sum(z * z, axis=-1, keepdims=True)
        # per-node L2 normalization via EUP rsqrt, then ReLU
        o_ref[...] = jnp.maximum(z * lax.rsqrt(jnp.maximum(ss, 1e-24)), 0.0)


def hypersage_layer(x_pad, inc_bf16, incT_bf16, inv_deg_e, inv_deg_v, w_pad, *, tn, te):
    """One HyperSAGE layer on padded operands. x_pad: (N_pad, Fin_pad) f32."""
    n_pad, fin_pad = x_pad.shape
    e_pad = inc_bf16.shape[1]
    fout_pad = w_pad.shape[1]

    # --- phase 1: per-edge generalized-mean messages (reduction over node tiles) ---
    mep = pl.pallas_call(
        _edge_kernel,
        out_shape=jax.ShapeDtypeStruct((e_pad, fin_pad), jnp.bfloat16),
        grid_spec=pltpu.PrefetchScalarGridSpec(
            num_scalar_prefetch=0,
            grid=(e_pad // te, n_pad // tn),
            in_specs=[
                pl.BlockSpec((te, tn), lambda e, n: (e, n)),        # incidence^T (bf16)
                pl.BlockSpec((tn, fin_pad), lambda e, n: (n, 0)),   # node features (f32)
                pl.BlockSpec((te, 1), lambda e, n: (e, 0)),         # 1/|B(e)|
            ],
            out_specs=pl.BlockSpec((te, fin_pad), lambda e, n: (e, 0)),
            scratch_shapes=[pltpu.VMEM((te, fin_pad), jnp.float32)],
        ),
        compiler_params=_COMPILER_PARAMS,
    )(incT_bf16, x_pad, inv_deg_e)

    # --- phase 2: per-node aggregation + weight matmul + L2 normalize + ReLU ---
    out = pl.pallas_call(
        _node_kernel,
        out_shape=jax.ShapeDtypeStruct((n_pad, fout_pad), jnp.float32),
        grid_spec=pltpu.PrefetchScalarGridSpec(
            num_scalar_prefetch=0,
            grid=(n_pad // tn, e_pad // te),
            in_specs=[
                pl.BlockSpec((tn, te), lambda n, e: (n, e)),            # incidence (bf16)
                pl.BlockSpec((te, fin_pad), lambda n, e: (e, 0)),       # edge messages (bf16)
                pl.BlockSpec((tn, 1), lambda n, e: (n, 0)),             # 1/|C(v)|
                pl.BlockSpec((fin_pad, fout_pad), lambda n, e: (0, 0)),  # weight (f32)
            ],
            out_specs=pl.BlockSpec((tn, fout_pad), lambda n, e: (n, 0)),
            scratch_shapes=[pltpu.VMEM((tn, fin_pad), jnp.float32)],
        ),
        compiler_params=_COMPILER_PARAMS,
    )(inc_bf16, mep, inv_deg_v, w_pad)
    return out


def hypersage_forward(x_0, incidence, weights, *, tn=256, te=256):
    """HyperSAGE.forward: sequential message-passing layers.

    Layer-invariant preprocessing (degrees, bf16 incidence + transpose, padding)
    is done once in plain XLA; tile sizes are multiples of 128 (lane-dense) and
    clamped to the padded problem size.
    """
    n_nodes, in_feat = x_0.shape
    n_edges = incidence.shape[1]
    f_out = weights[-1].shape[1]

    tn = min(tn, _round_up(n_nodes, 128))
    te = min(te, _round_up(n_edges, 128))
    n_pad = _round_up(n_nodes, tn)
    e_pad = _round_up(n_edges, te)

    inc = _pad2d(incidence.astype(jnp.float32), n_pad, e_pad)
    # degrees / reciprocals computed once for all layers (padded rows/cols have deg 0 -> guard 1)
    inv_deg_e = (1.0 / jnp.maximum(jnp.sum(inc, axis=0), 1.0)).reshape(e_pad, 1)
    inv_deg_v = (1.0 / jnp.maximum(jnp.sum(inc, axis=1), 1.0)).reshape(n_pad, 1)
    inc_bf16 = inc.astype(jnp.bfloat16)          # 0/1 exact in bf16
    incT_bf16 = inc.T.astype(jnp.bfloat16)       # pre-transposed: pure MXU matmul, no in-kernel vxpose

    x = _pad2d(x_0.astype(jnp.float32), n_pad, _round_up(in_feat, 128))
    for w in weights:
        w_pad = _pad2d(w.astype(jnp.float32),
                       _round_up(w.shape[0], 128), _round_up(w.shape[1], 128))
        x = hypersage_layer(x, inc_bf16, incT_bf16, inv_deg_e, inv_deg_v, w_pad, tn=tn, te=te)
    return x[:n_nodes, :f_out]


def hypersage_reference(x_0, incidence, weights):
    """Pure-JAX f32 reference with identical semantics (for a loose bf16 tolerance check)."""
    x = x_0.astype(jnp.float32)
    inc = incidence.astype(jnp.float32)
    inv_deg_e = 1.0 / jnp.maximum(jnp.sum(inc, axis=0, keepdims=True), 1.0)   # (1, E)
    inv_deg_v = 1.0 / jnp.maximum(jnp.sum(inc, axis=1, keepdims=True), 1.0)   # (N, 1)
    for w in weights:
        edge_mean = (inc.T @ (x * x)) * inv_deg_e.T        # (E, Fin)  == m_e^2
        node_mean = (inc @ edge_mean) * inv_deg_v          # (N, Fin)
        m = jnp.sqrt(node_mean)
        z = m @ w.astype(jnp.float32)
        norm = jnp.maximum(jnp.sqrt(jnp.sum(z * z, axis=-1, keepdims=True)), 1e-12)
        x = jnp.maximum(z / norm, 0.0)
    return x


if __name__ == "__main__":
    key = jax.random.PRNGKey(0)
    n_nodes, n_edges = 64, 32
    in_channels, hidden_channels, n_layers = 16, 32, 2

    k1, k2, k3, k4 = jax.random.split(key, 4)

    # node features
    x0 = jax.random.normal(k1, (n_nodes, in_channels), dtype=jnp.float32)

    # dense binary incidence (n_nodes, n_edges); ensure no empty rows/columns
    inc = (jax.random.uniform(k2, (n_nodes, n_edges)) < 0.25).astype(jnp.float32)
    inc = inc.at[jnp.arange(n_nodes), jnp.arange(n_nodes) % n_edges].set(1.0)

    # HyperSAGE(in_channels, hidden_channels, n_layers=2):
    #   layer 0: (in_channels  -> hidden_channels)
    #   layer 1: (hidden_channels -> hidden_channels)
    # deterministic "uniform" init: U(-stdv, stdv), stdv = 1/sqrt(out_channels)
    stdv = 1.0 / (hidden_channels ** 0.5)
    w1 = jax.random.uniform(k3, (in_channels, hidden_channels),
                            minval=-stdv, maxval=stdv, dtype=jnp.float32)
    w2 = jax.random.uniform(k4, (hidden_channels, hidden_channels),
                            minval=-stdv, maxval=stdv, dtype=jnp.float32)
    weights = [w1, w2]

    out = hypersage_forward(x0, inc, weights)
    jax.block_until_ready(out)
    assert out.shape == (n_nodes, hidden_channels)

    ref = hypersage_reference(x0, inc, weights)
    max_err = float(jnp.max(jnp.abs(out - ref)))
    assert max_err < 5e-2, f"mismatch vs f32 reference: {max_err}"

    print("KERNEL_OK")
</pallas_src>

<mosaic_0001>
module attributes {stable_mosaic.version = 11 : i64} {
  func.func @_edge_kernel(%arg0: i32, %arg1: i32, %arg2: memref<128x128xbf16, #tpu.memory_space<vmem>>, %arg3: memref<128x128xf32, #tpu.memory_space<vmem>>, %arg4: memref<128x1xf32, #tpu.memory_space<vmem>>, %arg5: memref<128x128xbf16, #tpu.memory_space<vmem>>, %arg6: memref<128x128xf32, #tpu.memory_space<vmem>>) attributes {dimension_semantics = [#tpu.dimension_semantics<parallel>, #tpu.dimension_semantics<arbitrary>], iteration_bounds = array<i64: 1, 1>, scalar_prefetch = 0 : i64, scratch_operands = 1 : i64, tpu.core_type = #tpu.core_type<tc>, window_params = [{transform_indices = @transform_0, window_bounds = array<i64: 128, 128>}, {transform_indices = @transform_1, window_bounds = array<i64: 128, 128>}, {transform_indices = @transform_2, window_bounds = array<i64: 128, 1>}, {transform_indices = @transform_3, window_bounds = array<i64: 128, 128>}]} {
    %c0_i32 = arith.constant 0 : i32
    %0 = arith.cmpi eq, %arg1, %c0_i32 : i32
    %1 = arith.extui %0 : i1 to i32
    %c0_i32_0 = arith.constant 0 : i32
    %2 = arith.cmpi ne, %1, %c0_i32_0 : i32
    scf.if %2 {
      %cst_10 = arith.constant 0.000000e+00 : f32
      %14 = vector.broadcast %cst_10 : f32 to vector<128x128xf32>
      %c0_11 = arith.constant 0 : index
      %c0_12 = arith.constant 0 : index
      %15 = vector.load %arg6[%c0_11, %c0_12] : memref<128x128xf32, #tpu.memory_space<vmem>>, vector<128x128xf32>
      tpu.vector_store %arg6[%c0_11, %c0_12], %14 {strides = array<i32>} : memref<128x128xf32, #tpu.memory_space<vmem>>, vector<128x128xf32>,
    } else {
    }
    %c0 = arith.constant 0 : index
    %c0_1 = arith.constant 0 : index
    %3 = vector.load %arg3[%c0, %c0_1] : memref<128x128xf32, #tpu.memory_space<vmem>>, vector<128x128xf32>
    %4 = arith.mulf %3, %3 : vector<128x128xf32>
    %5 = arith.truncf %4 : vector<128x128xf32> to vector<128x128xbf16>
    %c0_2 = arith.constant 0 : index
    %c0_3 = arith.constant 0 : index
    %6 = vector.load %arg6[%c0_2, %c0_3] : memref<128x128xf32, #tpu.memory_space<vmem>>, vector<128x128xf32>
    %c0_4 = arith.constant 0 : index
    %c0_5 = arith.constant 0 : index
    %7 = vector.load %arg2[%c0_4, %c0_5] : memref<128x128xbf16, #tpu.memory_space<vmem>>, vector<128x128xbf16>
    %cst = arith.constant dense<0.000000e+00> : vector<128x128xf32>
    %8 = tpu.matmul %7, %5, %cst {dimension_numbers = #tpu.dot_dimension_numbers<[1], [0], [0], [1], [0, 0, 1, 1], [], []>} : vector<128x128xbf16>, vector<128x128xbf16>, vector<128x128xf32> -> vector<128x128xf32>
    %9 = arith.addf %6, %8 : vector<128x128xf32>
    %c0_6 = arith.constant 0 : index
    %c0_7 = arith.constant 0 : index
    %10 = vector.load %arg6[%c0_6, %c0_7] : memref<128x128xf32, #tpu.memory_space<vmem>>, vector<128x128xf32>
    tpu.vector_store %arg6[%c0_6, %c0_7], %9 {strides = array<i32>} : memref<128x128xf32, #tpu.memory_space<vmem>>, vector<128x128xf32>,
    %c0_i32_8 = arith.constant 0 : i32
    %11 = arith.cmpi eq, %arg1, %c0_i32_8 : i32
    %12 = arith.extui %11 : i1 to i32
    %c0_i32_9 = arith.constant 0 : i32
    %13 = arith.cmpi ne, %12, %c0_i32_9 : i32
    scf.if %13 {
      %c0_10 = arith.constant 0 : index
      %c0_11 = arith.constant 0 : index
      %14 = vector.load %arg6[%c0_10, %c0_11] : memref<128x128xf32, #tpu.memory_space<vmem>>, vector<128x128xf32>
      %c0_12 = arith.constant 0 : index
      %c0_13 = arith.constant 0 : index
      %15 = vector.load %arg4[%c0_12, %c0_13] : memref<128x1xf32, #tpu.memory_space<vmem>>, vector<128x1xf32>
      %16 = vector.broadcast %15 : vector<128x1xf32> to vector<128x128xf32>
      %17 = arith.mulf %14, %16 : vector<128x128xf32>
      %18 = arith.truncf %17 : vector<128x128xf32> to vector<128x128xbf16>
      %c0_14 = arith.constant 0 : index
      %c0_15 = arith.constant 0 : index
      %19 = vector.load %arg5[%c0_14, %c0_15] : memref<128x128xbf16, #tpu.memory_space<vmem>>, vector<128x128xbf16>
      tpu.vector_store %arg5[%c0_14, %c0_15], %18 {strides = array<i32>} : memref<128x128xbf16, #tpu.memory_space<vmem>>, vector<128x128xbf16>,
    } else {
    }
    return
  }
  func.func @transform_0(%arg0: i32, %arg1: i32) -> (i32, i32) {
    %c0_i32 = arith.constant 0 : i32
    return %arg0, %arg1 : i32, i32
  }
  func.func @transform_1(%arg0: i32, %arg1: i32) -> (i32, i32) {
    %c0_i32 = arith.constant 0 : i32
    %c0_i32_0 = arith.constant 0 : i32
    return %arg1, %c0_i32 : i32, i32
  }
  func.func @transform_2(%arg0: i32, %arg1: i32) -> (i32, i32) {
    %c0_i32 = arith.constant 0 : i32
    %c0_i32_0 = arith.constant 0 : i32
    return %arg0, %c0_i32 : i32, i32
  }
  func.func @transform_3(%arg0: i32, %arg1: i32) -> (i32, i32) {
    %c0_i32 = arith.constant 0 : i32
    %c0_i32_0 = arith.constant 0 : i32
    return %arg0, %c0_i32 : i32, i32
  }
}

</mosaic_0001>

<llo_original>
// kernel: tpu_custom_call.1
$region0: #{tpu_custom_call.1}
  #allocation0 [shape = 'u32[]', space=smem, size = 0x4, offset = 0x4, fixed_abs, tag = 'smem constant byte address 0x4 - core index']
  #allocation1 [shape = 'u32[72,128]{1,0:T(1,128)}', space=vmem, size = 0x9000, scoped, tag = 'internal scratch']
  #allocation2 [shape = 'f32[128,128]{1,0:T(8,128)}', space=vmem, size = 0x10000, scoped, tag = 'scratch operand']
  %s0 = inlined_call_operand.hbm [shape: bf16[128,128], index: 0, kind: input, shape index: {}]
  %s1 = inlined_call_operand.vmem [shape: f32[128,128], index: 1, kind: input, shape index: {}]
  %s2 = inlined_call_operand.vmem [shape: f32[128,1], index: 2, kind: input, shape index: {}]
  %s3 = inlined_call_operand.hbm [shape: bf16[128,128], index: 3, kind: output, shape index: {}]
  %s4 = sld [smem:[#allocation0]]
  $region34: #{tpu_custom_call.1} parent=0
    _
  %s6 = ssub.s32 1, %s4
  %s7 = scalar_select 0, %s6, %s4
  $region1: #{tpu_custom_call.1} parent=0
    #allocation3 [shape = 'u8[32768]{0}', space=vmem, size = 0x8000, scoped, tag = 'input window, operand 0, single buffered']
    #allocation4 [shape = 's32[1]{0}', space=sflag, size = 0x4, scoped, tag = 'scoped memory for tpu_custom_call.1']
    #allocation5 [shape = 's32[1]{0}', space=sflag, size = 0x4, scoped, tag = 'scoped memory for tpu_custom_call.1']
    #allocation6 [shape = 'u8[32768]{0}', space=vmem, size = 0x8000, scoped, tag = 'output window, operand 0, single buffered']
    %8 = vsyncpa [#allocation4], 0
    %9 = vsyncpa [#allocation5], 0
    // Predicated region
    $region2: #{tpu_custom_call.1} parent=1 // pred_check
      _
    $region3: #{tpu_custom_call.1} parent=1 // pred_check_branch
      %11 = sbr.rel (0) target = $region5
    $region4: #{tpu_custom_call.1} parent=1 // pred_region
      %13 = vsyncadd [#allocation4], 0
      %s14 = sshll.u32 %s0, 4
      %s15 = int_to_ptr.hbm [resolvable:$true] %s14
      %s16 = sshll.u32 [#allocation3], 4
      %s17 = int_to_ptr.vmem [resolvable:$true] %s16
      %22 = dma.hbm_to_vmem [thread:$0]  %s15, 1024, %s17, [#allocation4], 64, 64, 4
    $region5: #{tpu_custom_call.1} parent=1 // pred_fallthru
      _
    // Predicated region
    $region6: #{tpu_custom_call.1} parent=1 // pred_check
      _
    $region7: #{tpu_custom_call.1} parent=1 // pred_check_branch
      %24 = sbr.rel (0) target = $region9
    $region8: #{tpu_custom_call.1} parent=1 // pred_region
      _
    $region9: #{tpu_custom_call.1} parent=1 // pred_fallthru
      _
    // Predicated region
    $region10: #{tpu_custom_call.1} parent=1 // pred_check
      _
    $region11: #{tpu_custom_call.1} parent=1 // pred_check_branch
      %26 = sbr.rel (0) target = $region13
    $region12: #{tpu_custom_call.1} parent=1 // pred_region
      _
    $region13: #{tpu_custom_call.1} parent=1 // pred_fallthru
      _
    // Predicated region
    $region14: #{tpu_custom_call.1} parent=1 // pred_check
      _
    $region15: #{tpu_custom_call.1} parent=1 // pred_check_branch
      %28 = sbr.rel (0) target = $region17
    $region16: #{tpu_custom_call.1} parent=1 // pred_region
      %30 = dma.done [#allocation4], 1024
    $region17: #{tpu_custom_call.1} parent=1 // pred_fallthru
      _
    %p31 = scmp.eq.s32.totalorder 0, 0
    // Predicated region
    $region18: #{tpu_custom_call.1} parent=1 // pred_check
      %p32 = pneg %p31
    $region19: #{tpu_custom_call.1} parent=1 // pred_check_branch
      %34 = sbr.rel (%p32) target = $region21
    $region20: #{tpu_custom_call.1} parent=1 // pred_region
      %35 = vst [vmem:[#allocation2] sm:$0xff] 0.0
      %36 = vst [vmem:[#allocation2 + $0x8] sm:$0xff] 0.0
      %37 = vst [vmem:[#allocation2 + $0x10] sm:$0xff] 0.0
      %38 = vst [vmem:[#allocation2 + $0x18] sm:$0xff] 0.0
      %39 = vst [vmem:[#allocation2 + $0x20] sm:$0xff] 0.0
      %40 = vst [vmem:[#allocation2 + $0x28] sm:$0xff] 0.0
      %41 = vst [vmem:[#allocation2 + $0x30] sm:$0xff] 0.0
      %42 = vst [vmem:[#allocation2 + $0x38] sm:$0xff] 0.0
      %43 = vst [vmem:[#allocation2 + $0x40] sm:$0xff] 0.0
      %44 = vst [vmem:[#allocation2 + $0x48] sm:$0xff] 0.0
      %45 = vst [vmem:[#allocation2 + $0x50] sm:$0xff] 0.0
      %46 = vst [vmem:[#allocation2 + $0x58] sm:$0xff] 0.0
      %47 = vst [vmem:[#allocation2 + $0x60] sm:$0xff] 0.0
      %48 = vst [vmem:[#allocation2 + $0x68] sm:$0xff] 0.0
      %49 = vst [vmem:[#allocation2 + $0x70] sm:$0xff] 0.0
      %50 = vst [vmem:[#allocation2 + $0x78] sm:$0xff] 0.0
    $region21: #{tpu_custom_call.1} parent=1 // pred_fallthru
      _
    %v51 = vld [vmem:[%s1] sm:$0xff]
    %v52 = vld [vmem:[%s1 + $0x8] sm:$0xff]
    %v53 = vld [vmem:[%s1 + $0x10] sm:$0xff]
    %v54 = vld [vmem:[%s1 + $0x18] sm:$0xff]
    %v55 = vld [vmem:[%s1 + $0x20] sm:$0xff]
    %v56 = vld [vmem:[%s1 + $0x28] sm:$0xff]
    %v57 = vld [vmem:[%s1 + $0x30] sm:$0xff]
    %v58 = vld [vmem:[%s1 + $0x38] sm:$0xff]
    %v59 = vld [vmem:[%s1 + $0x40] sm:$0xff]
    %v60 = vld [vmem:[%s1 + $0x48] sm:$0xff]
    %v61 = vld [vmem:[%s1 + $0x50] sm:$0xff]
    %v62 = vld [vmem:[%s1 + $0x58] sm:$0xff]
    %v63 = vld [vmem:[%s1 + $0x60] sm:$0xff]
    %v64 = vld [vmem:[%s1 + $0x68] sm:$0xff]
    %v65 = vld [vmem:[%s1 + $0x70] sm:$0xff]
    %v66 = vld [vmem:[%s1 + $0x78] sm:$0xff]
    %v67 = vmul.f32 %v51, %v51
    %v68 = vmul.f32 %v52, %v52
    %v69 = vmul.f32 %v53, %v53
    %v70 = vmul.f32 %v54, %v54
    %v71 = vmul.f32 %v55, %v55
    %v72 = vmul.f32 %v56, %v56
    %v73 = vmul.f32 %v57, %v57
    %v74 = vmul.f32 %v58, %v58
    %v75 = vmul.f32 %v59, %v59
    %v76 = vmul.f32 %v60, %v60
    %v77 = vmul.f32 %v61, %v61
    %v78 = vmul.f32 %v62, %v62
    %v79 = vmul.f32 %v63, %v63
    %v80 = vmul.f32 %v64, %v64
    %v81 = vmul.f32 %v65, %v65
    %v82 = vmul.f32 %v66, %v66
    %v83 = vpack.c.bf16 %v68, %v67
    %v84 = vpack.c.bf16 %v70, %v69
    %v85 = vpack.c.bf16 %v72, %v71
    %v86 = vpack.c.bf16 %v74, %v73
    %v87 = vpack.c.bf16 %v76, %v75
    %v88 = vpack.c.bf16 %v78, %v77
    %v89 = vpack.c.bf16 %v80, %v79
    %v90 = vpack.c.bf16 %v82, %v81
    %v91 = vld [vmem:[#allocation2] sm:$0xff]
    %v92 = vld [vmem:[#allocation2 + $0x8] sm:$0xff]
    %v93 = vld [vmem:[#allocation2 + $0x10] sm:$0xff]
    %v94 = vld [vmem:[#allocation2 + $0x18] sm:$0xff]
    %v95 = vld [vmem:[#allocation2 + $0x20] sm:$0xff]
    %v96 = vld [vmem:[#allocation2 + $0x28] sm:$0xff]
    %v97 = vld [vmem:[#allocation2 + $0x30] sm:$0xff]
    %v98 = vld [vmem:[#allocation2 + $0x38] sm:$0xff]
    %v99 = vld [vmem:[#allocation2 + $0x40] sm:$0xff]
    %v100 = vld [vmem:[#allocation2 + $0x48] sm:$0xff]
    %v101 = vld [vmem:[#allocation2 + $0x50] sm:$0xff]
    %v102 = vld [vmem:[#allocation2 + $0x58] sm:$0xff]
    %v103 = vld [vmem:[#allocation2 + $0x60] sm:$0xff]
    %v104 = vld [vmem:[#allocation2 + $0x68] sm:$0xff]
    %v105 = vld [vmem:[#allocation2 + $0x70] sm:$0xff]
    %v106 = vld [vmem:[#allocation2 + $0x78] sm:$0xff]
    %v107 = vld [vmem:[#allocation3] sm:$0xf]
    %v108 = vld [vmem:[#allocation3 + $0x4] sm:$0xf]
    %v109 = vld [vmem:[#allocation3 + $0x8] sm:$0xf]
    %v110 = vld [vmem:[#allocation3 + $0xc] sm:$0xf]
    %v111 = vld [vmem:[#allocation3 + $0x10] sm:$0xf]
    %v112 = vld [vmem:[#allocation3 + $0x14] sm:$0xf]
    %v113 = vld [vmem:[#allocation3 + $0x18] sm:$0xf]
    %v114 = vld [vmem:[#allocation3 + $0x1c] sm:$0xf]
    %v115 = vld [vmem:[#allocation3 + $0x20] sm:$0xf]
    %v116 = vld [vmem:[#allocation3 + $0x24] sm:$0xf]
    %v117 = vld [vmem:[#allocation3 + $0x28] sm:$0xf]
    %v118 = vld [vmem:[#allocation3 + $0x2c] sm:$0xf]
    %v119 = vld [vmem:[#allocation3 + $0x30] sm:$0xf]
    %v120 = vld [vmem:[#allocation3 + $0x34] sm:$0xf]
    %v121 = vld [vmem:[#allocation3 + $0x38] sm:$0xf]
    %v122 = vld [vmem:[#allocation3 + $0x3c] sm:$0xf]
    %v139 = vunpack.c.l.b16 %v107
    %v140 = vunpack.c.l.b16 %v108
    %v141 = vunpack.c.l.b16 %v109
    %v142 = vunpack.c.l.b16 %v110
    %v143 = vunpack.c.l.b16 %v111
    %v144 = vunpack.c.l.b16 %v112
    %v145 = vunpack.c.l.b16 %v113
    %v146 = vunpack.c.l.b16 %v114
    %v147 = vunpack.c.l.b16 %v115
    %v148 = vunpack.c.l.b16 %v116
    %v149 = vunpack.c.l.b16 %v117
    %v150 = vunpack.c.l.b16 %v118
    %v151 = vunpack.c.l.b16 %v119
    %v152 = vunpack.c.l.b16 %v120
    %v153 = vunpack.c.l.b16 %v121
    %v154 = vunpack.c.l.b16 %v122
    %v155 = vpack.c.b16 %v140, %v139
    %v156 = vpack.c.b16 %v142, %v141
    %v157 = vpack.c.b16 %v144, %v143
    %v158 = vpack.c.b16 %v146, %v145
    %v159 = vpack.c.b16 %v148, %v147
    %v160 = vpack.c.b16 %v150, %v149
    %v161 = vpack.c.b16 %v152, %v151
    %v162 = vpack.c.b16 %v154, %v153
    %171 = vmatpush.bf16.msra.mxu0 %v90
    %172 = vmatpush.bf16.msra.mxu0 %v89
    %173 = vmatpush.bf16.msra.mxu0 %v88
    %174 = vmatpush.bf16.msra.mxu0 %v87
    %175 = vmatpush.bf16.msra.mxu0 %v86
    %176 = vmatpush.bf16.msra.mxu0 %v85
    %177 = vmatpush.bf16.msra.mxu0 %v84
    %178 = vmatpush.bf16.msra.mxu0 %v83
    %179 = vmatmul.bf16.gmra.mxu0 %v155
    %v180 = vpop.f32.mrf.mxu0
    %v181 = vadd.f32 0.0, %v180
    %v182 = vpop.f32.mrf.mxu0
    %v183 = vadd.f32 0.0, %v182
    %184 = vmatmul.bf16.gmra.mxu0 %v156
    %v185 = vpop.f32.mrf.mxu0
    %v186 = vadd.f32 0.0, %v185
    %v187 = vpop.f32.mrf.mxu0
    %v188 = vadd.f32 0.0, %v187
    %189 = vmatmul.bf16.gmra.mxu0 %v157
    %v190 = vpop.f32.mrf.mxu0
    %v191 = vadd.f32 0.0, %v190
    %v192 = vpop.f32.mrf.mxu0
    %v193 = vadd.f32 0.0, %v192
    %194 = vmatmul.bf16.gmra.mxu0 %v158
    %v195 = vpop.f32.mrf.mxu0
    %v196 = vadd.f32 0.0, %v195
    %v197 = vpop.f32.mrf.mxu0
    %v198 = vadd.f32 0.0, %v197
    %199 = vmatmul.bf16.gmra.mxu0 %v159
    %v200 = vpop.f32.mrf.mxu0
    %v201 = vadd.f32 0.0, %v200
    %v202 = vpop.f32.mrf.mxu0
    %v203 = vadd.f32 0.0, %v202
    %204 = vmatmul.bf16.gmra.mxu0 %v160
    %v205 = vpop.f32.mrf.mxu0
    %v206 = vadd.f32 0.0, %v205
    %v207 = vpop.f32.mrf.mxu0
    %v208 = vadd.f32 0.0, %v207
    %209 = vmatmul.bf16.gmra.mxu0 %v161
    %v210 = vpop.f32.mrf.mxu0
    %v211 = vadd.f32 0.0, %v210
    %v212 = vpop.f32.mrf.mxu0
    %v213 = vadd.f32 0.0, %v212
    %214 = vmatmul.bf16.gmra.mxu0 %v162
    %v215 = vpop.f32.mrf.mxu0
    %v216 = vadd.f32 0.0, %v215
    %v217 = vpop.f32.mrf.mxu0
    %v218 = vadd.f32 0.0, %v217
    %219 = vdwg.mxu0
    %v220 = vadd.f32 %v91, %v181
    %v221 = vadd.f32 %v92, %v183
    %v222 = vadd.f32 %v93, %v186
    %v223 = vadd.f32 %v94, %v188
    %v224 = vadd.f32 %v95, %v191
    %v225 = vadd.f32 %v96, %v193
    %v226 = vadd.f32 %v97, %v196
    %v227 = vadd.f32 %v98, %v198
    %v228 = vadd.f32 %v99, %v201
    %v229 = vadd.f32 %v100, %v203
    %v230 = vadd.f32 %v101, %v206
    %v231 = vadd.f32 %v102, %v208
    %v232 = vadd.f32 %v103, %v211
    %v233 = vadd.f32 %v104, %v213
    %v234 = vadd.f32 %v105, %v216
    %v235 = vadd.f32 %v106, %v218
    %236 = vst [vmem:[#allocation2] sm:$0xff] %v220
    %237 = vst [vmem:[#allocation2 + $0x8] sm:$0xff] %v221
    %238 = vst [vmem:[#allocation2 + $0x10] sm:$0xff] %v222
    %239 = vst [vmem:[#allocation2 + $0x18] sm:$0xff] %v223
    %240 = vst [vmem:[#allocation2 + $0x20] sm:$0xff] %v224
    %241 = vst [vmem:[#allocation2 + $0x28] sm:$0xff] %v225
    %242 = vst [vmem:[#allocation2 + $0x30] sm:$0xff] %v226
    %243 = vst [vmem:[#allocation2 + $0x38] sm:$0xff] %v227
    %244 = vst [vmem:[#allocation2 + $0x40] sm:$0xff] %v228
    %245 = vst [vmem:[#allocation2 + $0x48] sm:$0xff] %v229
    %246 = vst [vmem:[#allocation2 + $0x50] sm:$0xff] %v230
    %247 = vst [vmem:[#allocation2 + $0x58] sm:$0xff] %v231
    %248 = vst [vmem:[#allocation2 + $0x60] sm:$0xff] %v232
    %249 = vst [vmem:[#allocation2 + $0x68] sm:$0xff] %v233
    %250 = vst [vmem:[#allocation2 + $0x70] sm:$0xff] %v234
    %251 = vst [vmem:[#allocation2 + $0x78] sm:$0xff] %v235
    // Predicated region
    $region22: #{tpu_custom_call.1} parent=1 // pred_check
      %p252 = pneg %p31
    $region23: #{tpu_custom_call.1} parent=1 // pred_check_branch
      %254 = sbr.rel (%p252) target = $region25
    $region24: #{tpu_custom_call.1} parent=1 // pred_region
      %v255 = vld [vmem:[#allocation2] sm:$0xff]
      %v256 = vld [vmem:[#allocation2 + $0x8] sm:$0xff]
      %v257 = vld [vmem:[#allocation2 + $0x10] sm:$0xff]
      %v258 = vld [vmem:[#allocation2 + $0x18] sm:$0xff]
      %v259 = vld [vmem:[#allocation2 + $0x20] sm:$0xff]
      %v260 = vld [vmem:[#allocation2 + $0x28] sm:$0xff]
      %v261 = vld [vmem:[#allocation2 + $0x30] sm:$0xff]
      %v262 = vld [vmem:[#allocation2 + $0x38] sm:$0xff]
      %v263 = vld [vmem:[#allocation2 + $0x40] sm:$0xff]
      %v264 = vld [vmem:[#allocation2 + $0x48] sm:$0xff]
      %v265 = vld [vmem:[#allocation2 + $0x50] sm:$0xff]
      %v266 = vld [vmem:[#allocation2 + $0x58] sm:$0xff]
      %v267 = vld [vmem:[#allocation2 + $0x60] sm:$0xff]
      %v268 = vld [vmem:[#allocation2 + $0x68] sm:$0xff]
      %v269 = vld [vmem:[#allocation2 + $0x70] sm:$0xff]
      %v270 = vld [vmem:[#allocation2 + $0x78] sm:$0xff]
      %v271 = vld [vmem:[%s2] sm:$0xff]
      %v272 = vld [vmem:[%s2 + $0x8] sm:$0xff]
      %v273 = vld [vmem:[%s2 + $0x10] sm:$0xff]
      %v274 = vld [vmem:[%s2 + $0x18] sm:$0xff]
      %v275 = vld [vmem:[%s2 + $0x20] sm:$0xff]
      %v276 = vld [vmem:[%s2 + $0x28] sm:$0xff]
      %v277 = vld [vmem:[%s2 + $0x30] sm:$0xff]
      %v278 = vld [vmem:[%s2 + $0x38] sm:$0xff]
      %v279 = vld [vmem:[%s2 + $0x40] sm:$0xff]
      %v280 = vld [vmem:[%s2 + $0x48] sm:$0xff]
      %v281 = vld [vmem:[%s2 + $0x50] sm:$0xff]
      %v282 = vld [vmem:[%s2 + $0x58] sm:$0xff]
      %v283 = vld [vmem:[%s2 + $0x60] sm:$0xff]
      %v284 = vld [vmem:[%s2 + $0x68] sm:$0xff]
      %v285 = vld [vmem:[%s2 + $0x70] sm:$0xff]
      %v286 = vld [vmem:[%s2 + $0x78] sm:$0xff]
      %288 = vset.pattern.permute.xlu0 0
      %289 = vperm.xlu0 %288, %v271
      %v290 = vpop.permute.xlu0 %289
      %293 = vset.pattern.permute.xlu0 0
      %294 = vperm.xlu0 %293, %v272
      %v295 = vpop.permute.xlu0 %294
      %298 = vset.pattern.permute.xlu0 0
      %299 = vperm.xlu0 %298, %v273
      %v300 = vpop.permute.xlu0 %299
      %303 = vset.pattern.permute.xlu0 0
      %304 = vperm.xlu0 %303, %v274
      %v305 = vpop.permute.xlu0 %304
      %308 = vset.pattern.permute.xlu0 0
      %309 = vperm.xlu0 %308, %v275
      %v310 = vpop.permute.xlu0 %309
      %313 = vset.pattern.permute.xlu0 0
      %314 = vperm.xlu0 %313, %v276
      %v315 = vpop.permute.xlu0 %314
      %318 = vset.pattern.permute.xlu0 0
      %319 = vperm.xlu0 %318, %v277
      %v320 = vpop.permute.xlu0 %319
      %323 = vset.pattern.permute.xlu0 0
      %324 = vperm.xlu0 %323, %v278
      %v325 = vpop.permute.xlu0 %324
      %328 = vset.pattern.permute.xlu0 0
      %329 = vperm.xlu0 %328, %v279
      %v330 = vpop.permute.xlu0 %329
      %333 = vset.pattern.permute.xlu0 0
      %334 = vperm.xlu0 %333, %v280
      %v335 = vpop.permute.xlu0 %334
      %338 = vset.pattern.permute.xlu0 0
      %339 = vperm.xlu0 %338, %v281
      %v340 = vpop.permute.xlu0 %339
      %343 = vset.pattern.permute.xlu0 0
      %344 = vperm.xlu0 %343, %v282
      %v345 = vpop.permute.xlu0 %344
      %348 = vset.pattern.permute.xlu0 0
      %349 = vperm.xlu0 %348, %v283
      %v350 = vpop.permute.xlu0 %349
      %353 = vset.pattern.permute.xlu0 0
      %354 = vperm.xlu0 %353, %v284
      %v355 = vpop.permute.xlu0 %354
      %358 = vset.pattern.permute.xlu0 0
      %359 = vperm.xlu0 %358, %v285
      %v360 = vpop.permute.xlu0 %359
      %363 = vset.pattern.permute.xlu0 0
      %364 = vperm.xlu0 %363, %v286
      %v365 = vpop.permute.xlu0 %364
      %v367 = vmul.f32 %v255, %v290
      %v368 = vmul.f32 %v256, %v295
      %v369 = vmul.f32 %v257, %v300
      %v370 = vmul.f32 %v258, %v305
      %v371 = vmul.f32 %v259, %v310
      %v372 = vmul.f32 %v260, %v315
      %v373 = vmul.f32 %v261, %v320
      %v374 = vmul.f32 %v262, %v325
      %v375 = vmul.f32 %v263, %v330
      %v376 = vmul.f32 %v264, %v335
      %v377 = vmul.f32 %v265, %v340
      %v378 = vmul.f32 %v266, %v345
      %v379 = vmul.f32 %v267, %v350
      %v380 = vmul.f32 %v268, %v355
      %v381 = vmul.f32 %v269, %v360
      %v382 = vmul.f32 %v270, %v365
      %v383 = vpack.c.bf16 %v367, %v367
      %v384 = vpack.c.bf16 %v368, %v368
      %v385 = vpack.c.bf16 %v369, %v369
      %v386 = vpack.c.bf16 %v370, %v370
      %v387 = vpack.c.bf16 %v371, %v371
      %v388 = vpack.c.bf16 %v372, %v372
      %v389 = vpack.c.bf16 %v373, %v373
      %v390 = vpack.c.bf16 %v374, %v374
      %v391 = vpack.c.bf16 %v375, %v375
      %v392 = vpack.c.bf16 %v376, %v376
      %v393 = vpack.c.bf16 %v377, %v377
      %v394 = vpack.c.bf16 %v378, %v378
      %v395 = vpack.c.bf16 %v379, %v379
      %v396 = vpack.c.bf16 %v380, %v380
      %v397 = vpack.c.bf16 %v381, %v381
      %v398 = vpack.c.bf16 %v382, %v382
      %399 = vst [vmem:[#allocation6] sm:$0xf] %v383
      %400 = vst [vmem:[#allocation6 + $0x4] sm:$0xf] %v384
      %401 = vst [vmem:[#allocation6 + $0x8] sm:$0xf] %v385
      %402 = vst [vmem:[#allocation6 + $0xc] sm:$0xf] %v386
      %403 = vst [vmem:[#allocation6 + $0x10] sm:$0xf] %v387
      %404 = vst [vmem:[#allocation6 + $0x14] sm:$0xf] %v388
      %405 = vst [vmem:[#allocation6 + $0x18] sm:$0xf] %v389
      %406 = vst [vmem:[#allocation6 + $0x1c] sm:$0xf] %v390
      %407 = vst [vmem:[#allocation6 + $0x20] sm:$0xf] %v391
      %408 = vst [vmem:[#allocation6 + $0x24] sm:$0xf] %v392
      %409 = vst [vmem:[#allocation6 + $0x28] sm:$0xf] %v393
      %410 = vst [vmem:[#allocation6 + $0x2c] sm:$0xf] %v394
      %411 = vst [vmem:[#allocation6 + $0x30] sm:$0xf] %v395
      %412 = vst [vmem:[#allocation6 + $0x34] sm:$0xf] %v396
      %413 = vst [vmem:[#allocation6 + $0x38] sm:$0xf] %v397
      %414 = vst [vmem:[#allocation6 + $0x3c] sm:$0xf] %v398
    $region25: #{tpu_custom_call.1} parent=1 // pred_fallthru
      _
    // Predicated region
    $region26: #{tpu_custom_call.1} parent=1 // pred_check
      _
    $region27: #{tpu_custom_call.1} parent=1 // pred_check_branch
      %416 = sbr.rel (0) target = $region29
    $region28: #{tpu_custom_call.1} parent=1 // pred_region
      %418 = vsyncadd [#allocation5], 0
      %s419 = sshll.u32 [#allocation6], 4
      %s420 = int_to_ptr.vmem [resolvable:$true] %s419
      %s421 = sshll.u32 %s3, 4
      %s422 = int_to_ptr.hbm [resolvable:$true] %s421
      %427 = dma.vmem_to_hbm [thread:$0]  %s420, 1024, %s422, [#allocation5], 64, 64, 4
    $region29: #{tpu_custom_call.1} parent=1 // pred_fallthru
      _
    // Predicated region
    $region30: #{tpu_custom_call.1} parent=1 // pred_check
      _
    $region31: #{tpu_custom_call.1} parent=1 // pred_check_branch
      %429 = sbr.rel (0) target = $region33
    $region32: #{tpu_custom_call.1} parent=1 // pred_region
      %431 = dma.done [#allocation5], 1024
    $region33: #{tpu_custom_call.1} parent=1 // pred_fallthru
      _
    %432 = vsyncpa [#allocation4], 1
    %433 = vsyncpa [#allocation5], 1

</llo_original>
